<compile_context>
chip_gen: v7x
topology: tpu7x:2x2x1
jax: 0.10.0
libtpu: 0.0.40
codegen_flags: <defaults>
</compile_context>

<pallas_src>
import functools

import jax
import jax.numpy as jnp
import numpy as np
from jax.experimental import pallas as pl
from jax.experimental.pallas import tpu as pltpu

_VMEM_LIMIT = 48 * 1024 * 1024   # within v7x's 64 MiB physical VMEM, above v5e/v6e defaults


def _round_up(x, m):
    return ((x + m - 1) // m) * m


def _choose_tiling(seq_len):
    """(tile_s, S_full, n_tiles): minimise padding instead of rounding up to a full 512."""
    if seq_len <= 512:
        ts = _round_up(seq_len, 16)          # multiple of 16: bf16-sublane friendly
        return ts, ts, 1
    best = None
    for cand in (512, 256, 128):
        s_full = _round_up(seq_len, cand)
        key = (s_full - seq_len, -cand)      # least padding, then biggest tile
        if best is None or key < best[0]:
            best = (key, (cand, s_full))
    ts, s_full = best[1]
    return ts, s_full, s_full // ts


def _tile_h(h):
    if h <= 512 or h % 128 != 0:
        return h
    for cand in (512, 256, 128):
        if h % cand == 0:
            return cand
    return h


# --------------------------------------------------------------------------- keys kernel
def _keys_kernel(enc_ref, wk_t_ref, keys_ref):
    # (ts, 2H) @ (2H, th) -> (ts, th) in f32 on the MXU, stored as bf16 cache.
    keys_ref[...] = jnp.dot(enc_ref[...], wk_t_ref[...],
                            preferred_element_type=jnp.float32).astype(jnp.bfloat16)


def precompute_keys(params, encoder_outputs):
    """Encoder-key projection. Compute once per source sentence, reuse every decode step."""
    S, twoH = encoder_outputs.shape
    H = twoH // 2
    ts, S_full, nt_s = _choose_tiling(S)
    enc = encoder_outputs
    if S_full != S:
        enc = jnp.pad(enc, ((0, S_full - S), (0, 0)))
    wk_t = params["wk"].T                     # (2H, H) static pre-transpose
    th = _tile_h(H)
    nt_h = H // th
    keys = pl.pallas_call(
        _keys_kernel,
        out_shape=jax.ShapeDtypeStruct((S_full, H), jnp.bfloat16),
        grid_spec=pltpu.PrefetchScalarGridSpec(
            num_scalar_prefetch=0,
            grid=(nt_s, nt_h),
            in_specs=[pl.BlockSpec((ts, twoH), lambda i, j: (i, 0)),
                      pl.BlockSpec((twoH, th), lambda i, j: (0, j))],
            out_specs=pl.BlockSpec((ts, th), lambda i, j: (i, j)),
        ),
        compiler_params=pltpu.CompilerParams(
            dimension_semantics=("parallel", "parallel"),
            vmem_limit_bytes=_VMEM_LIMIT),
    )(enc, wk_t)
    return keys                               # (S_full, H) bf16


# --------------------------------------------------------------------- per-step attention
def _scores_kernel(qn_ref, wqn_t_ref, we_ref, keys_ref, s_ref, *, ts, seq_len):
    # Query(+ney) projection: tiny M=1 bf16 MXU matmul. Recomputed per key tile so the
    # grid has no cross-tile carry and stays safe under "parallel" (2 TCs on v7x).
    q = jnp.dot(qn_ref[...], wqn_t_ref[...],
                preferred_element_type=jnp.float32)                    # (1, H) f32
    e = jnp.tanh(keys_ref[...].astype(jnp.float32) + q)                # (ts, H) f32
    # energy: contract We (1, H) with e over H -> lane-dense (1, ts) raw scores.
    scores = jax.lax.dot_general(we_ref[...], e,
                                 dimension_numbers=(((1,), (1,)), ((), ())),
                                 preferred_element_type=jnp.float32)
    s_ref[...] = scores
    rem = seq_len % ts
    if rem:                                   # static: padding exists, only in last tile
        @pl.when(pl.program_id(0) == pl.num_programs(0) - 1)
        def _mask():
            col = jax.lax.broadcasted_iota(jnp.int32, (1, ts), 1)
            s_ref[...] = jnp.where(col < rem, scores, -1e30)   # keep mask in f32


def _softmax_kernel(s_ref, p_ref):
    s = s_ref[...]
    ex = jnp.exp(s - jnp.max(s, axis=1, keepdims=True))
    p_ref[...] = ex / jnp.sum(ex, axis=1, keepdims=True)       # exact division


def prepare_attn_state(params, encoder_outputs, *, do_ney):
    """Everything decode-step-invariant: bf16 keys cache + fused bf16 query/ney weight."""
    keys = precompute_keys(params, encoder_outputs)
    if do_ney:
        wqn_t = jnp.concatenate([params["wq"].T, params["wn"].T], axis=0)  # (H+E, H)
    else:
        wqn_t = params["wq"].T                                             # (H, H)
    return keys, wqn_t.astype(jnp.bfloat16), params["we"]


def attn_step(keys, wqn_t, we, hidden, current_word_emb, seq_len, *, do_ney):
    """One decode step given cached state. Returns (1, seq_len) attention probabilities."""
    S_full, H = keys.shape
    ts, S_full_expected, nt = _choose_tiling(seq_len)
    assert S_full == S_full_expected, (S_full, S_full_expected)

    if do_ney:
        qn = jnp.concatenate([hidden, current_word_emb], axis=1)   # (1, H+E)
    else:
        qn = hidden
    qn = qn.astype(jnp.bfloat16)
    Hq = qn.shape[1]

    kernel = functools.partial(_scores_kernel, ts=ts, seq_len=seq_len)
    scores = pl.pallas_call(
        kernel,
        out_shape=jax.ShapeDtypeStruct((1, S_full), jnp.float32),
        grid_spec=pltpu.PrefetchScalarGridSpec(
            num_scalar_prefetch=0,
            grid=(nt,),
            in_specs=[pl.BlockSpec((1, Hq), lambda j: (0, 0)),
                      pl.BlockSpec((Hq, H), lambda j: (0, 0)),
                      pl.BlockSpec((1, H), lambda j: (0, 0)),
                      pl.BlockSpec((ts, H), lambda j: (j, 0))],
            out_specs=pl.BlockSpec((1, ts), lambda j: (0, j)),
        ),
        compiler_params=pltpu.CompilerParams(
            dimension_semantics=("parallel",),       # independent tiles -> both v7x TCs
            vmem_limit_bytes=_VMEM_LIMIT),
    )(qn, wqn_t, we, keys)

    probs = pl.pallas_call(
        _softmax_kernel,
        out_shape=jax.ShapeDtypeStruct((1, S_full), jnp.float32),
        grid=(1,),
        in_specs=[pl.BlockSpec((1, S_full), lambda i: (0, 0))],
        out_specs=pl.BlockSpec((1, S_full), lambda i: (0, 0)),
    )(scores)
    return probs[:, :seq_len]


@functools.partial(jax.jit, static_argnames=("do_ney",))
def attn_forward(params, hidden, encoder_outputs, current_word_emb, *, do_ney=False):
    """Full module forward. In a real decode loop, call prepare_attn_state() once per
    sentence and attn_step() per decode step."""
    keys, wqn_t, we = prepare_attn_state(params, encoder_outputs, do_ney=do_ney)
    probs = attn_step(keys, wqn_t, we, hidden, current_word_emb,
                      encoder_outputs.shape[0], do_ney=do_ney)
    return probs[None]                                  # (1, 1, S)


# -------------------------------------------------------------------------------- helpers
def init_params(key, hidden_size, output_emb_size):
    """Deterministic PyTorch-style kaiming-uniform init for the bias-free Linears."""
    kq, kk, kn, ke = jax.random.split(key, 4)

    def lin(k, out_f, in_f):
        bound = 1.0 / np.sqrt(in_f)
        return jax.random.uniform(k, (out_f, in_f), jnp.float32, -bound, bound)

    return {
        "wq": lin(kq, hidden_size, hidden_size),          # query_layer
        "wk": lin(kk, hidden_size, 2 * hidden_size),      # key_layer
        "wn": lin(kn, hidden_size, output_emb_size),      # ney_layer
        "we": lin(ke, 1, hidden_size),                    # energy_layer
    }


def attn_reference(params, hidden, encoder_outputs, current_word_emb, *, do_ney):
    """Pure-JAX f32 reference mirroring the PyTorch forward exactly."""
    keys = encoder_outputs @ params["wk"].T
    query = hidden @ params["wq"].T
    if do_ney:
        ney = current_word_emb @ params["wn"].T
        scores = jnp.tanh(query + keys + ney) @ params["we"].T
    else:
        scores = jnp.tanh(query + keys) @ params["we"].T
    energies = jnp.squeeze(scores)                        # (S,)
    return jax.nn.softmax(energies, axis=0)[None, None]   # (1, 1, S)


def _check(params, hidden, enc, cwe, do_ney):
    out = attn_forward(params, hidden, enc, cwe, do_ney=do_ney)
    out = jax.block_until_ready(out)
    ref = attn_reference(params, hidden, enc, cwe, do_ney=do_ney)
    assert out.shape == (1, 1, enc.shape[0]), out.shape
    # tolerance reflects the bf16 keys / query-weight cache (scores & softmax stay f32)
    np.testing.assert_allclose(np.asarray(out), np.asarray(ref),
                               rtol=2e-2, atol=1e-5)


if __name__ == "__main__":
    root = jax.random.PRNGKey(0)

    # --- small config matching the module's intended shapes -----------------------------
    HIDDEN, EMB, SEQ = 32, 16, 8
    kp, kh, kenc, kcwe = jax.random.split(root, 4)
    params = init_params(kp, HIDDEN, EMB)
    hidden = jax.random.normal(kh, (1, HIDDEN), jnp.float32)
    enc = jax.random.normal(kenc, (SEQ, 2 * HIDDEN), jnp.float32)
    cwe = jax.random.normal(kcwe, (1, EMB), jnp.float32)
    _check(params, hidden, enc, cwe, do_ney=True)
    _check(params, hidden, enc, cwe, do_ney=False)

    # --- larger config exercising multi-tile S, minimal padding and last-tile masking ---
    HIDDEN2, EMB2, SEQ2 = 64, 32, 600     # 600 -> five 128-row tiles (S_full=640, 40 pad rows)
    kp2, kh2, kenc2, kcwe2 = jax.random.split(jax.random.PRNGKey(1), 4)
    params2 = init_params(kp2, HIDDEN2, EMB2)
    hidden2 = jax.random.normal(kh2, (1, HIDDEN2), jnp.float32)
    enc2 = jax.random.normal(kenc2, (SEQ2, 2 * HIDDEN2), jnp.float32)
    cwe2 = jax.random.normal(kcwe2, (1, EMB2), jnp.float32)
    _check(params2, hidden2, enc2, cwe2, do_ney=True)

    print("KERNEL_OK")
</pallas_src>

<mosaic_0001>
module attributes {stable_mosaic.version = 11 : i64} {
  func.func @_scores_kernel(%arg0: i32, %arg1: memref<1x48xbf16, #tpu.memory_space<vmem>>, %arg2: memref<48x32xbf16, #tpu.memory_space<vmem>>, %arg3: memref<1x32xf32, #tpu.memory_space<vmem>>, %arg4: memref<16x32xbf16, #tpu.memory_space<vmem>>, %arg5: memref<1x16xf32, #tpu.memory_space<vmem>>) attributes {dimension_semantics = [#tpu.dimension_semantics<parallel>], iteration_bounds = array<i64: 1>, scalar_prefetch = 0 : i64, scratch_operands = 0 : i64, tpu.core_type = #tpu.core_type<tc>, window_params = [{pipeline_mode = #tpu.pipeline_mode<synchronous>, transform_indices = @transform_0, window_bounds = array<i64: 1, 48>}, {pipeline_mode = #tpu.pipeline_mode<synchronous>, transform_indices = @transform_1, window_bounds = array<i64: 48, 32>}, {pipeline_mode = #tpu.pipeline_mode<synchronous>, transform_indices = @transform_2, window_bounds = array<i64: 1, 32>}, {transform_indices = @transform_3, window_bounds = array<i64: 16, 32>}, {transform_indices = @transform_4, window_bounds = array<i64: 1, 16>}]} {
    %c0 = arith.constant 0 : index
    %c0_0 = arith.constant 0 : index
    %0 = vector.load %arg1[%c0, %c0_0] : memref<1x48xbf16, #tpu.memory_space<vmem>>, vector<1x48xbf16>
    %c0_1 = arith.constant 0 : index
    %c0_2 = arith.constant 0 : index
    %1 = vector.load %arg2[%c0_1, %c0_2] : memref<48x32xbf16, #tpu.memory_space<vmem>>, vector<48x32xbf16>
    %cst = arith.constant dense<0.000000e+00> : vector<1x32xf32>
    %2 = tpu.matmul %0, %1, %cst {dimension_numbers = #tpu.dot_dimension_numbers<[1], [0], [0], [1], [0, 0, 1, 1], [], []>} : vector<1x48xbf16>, vector<48x32xbf16>, vector<1x32xf32> -> vector<1x32xf32>
    %c0_3 = arith.constant 0 : index
    %c0_4 = arith.constant 0 : index
    %3 = vector.load %arg4[%c0_3, %c0_4] : memref<16x32xbf16, #tpu.memory_space<vmem>>, vector<16x32xbf16>
    %4 = arith.extf %3 : vector<16x32xbf16> to vector<16x32xf32>
    %5 = vector.broadcast %2 : vector<1x32xf32> to vector<16x32xf32>
    %6 = arith.addf %4, %5 : vector<16x32xf32>
    %7 = math.tanh %6 : vector<16x32xf32>
    %c0_5 = arith.constant 0 : index
    %c0_6 = arith.constant 0 : index
    %8 = vector.load %arg3[%c0_5, %c0_6] : memref<1x32xf32, #tpu.memory_space<vmem>>, vector<1x32xf32>
    %cst_7 = arith.constant dense<0.000000e+00> : vector<1x16xf32>
    %9 = tpu.matmul %8, %7, %cst_7 {dimension_numbers = #tpu.dot_dimension_numbers<[1], [1], [0], [0], [0, 0, 1, 0], [], []>} : vector<1x32xf32>, vector<16x32xf32>, vector<1x16xf32> -> vector<1x16xf32>
    %c0_8 = arith.constant 0 : index
    %c0_9 = arith.constant 0 : index
    %10 = vector.load %arg5[%c0_8, %c0_9] : memref<1x16xf32, #tpu.memory_space<vmem>>, vector<1x16xf32>
    tpu.vector_store %arg5[%c0_8, %c0_9], %9 {strides = array<i32>} : memref<1x16xf32, #tpu.memory_space<vmem>>, vector<1x16xf32>,
    %c0_i32 = arith.constant 0 : i32
    %11 = arith.cmpi eq, %arg0, %c0_i32 : i32
    %12 = arith.extui %11 : i1 to i32
    %c0_i32_10 = arith.constant 0 : i32
    %13 = arith.cmpi ne, %12, %c0_i32_10 : i32
    scf.if %13 {
      %14 = tpu.iota {dimensions = array<i32: 1>} : vector<1x16xi32>
      %c8_i32 = arith.constant 8 : i32
      %15 = vector.broadcast %c8_i32 : i32 to vector<1x16xi32>
      %16 = arith.cmpi slt, %14, %15 : vector<1x16xi32>
      %cst_11 = arith.constant -1.000000e+30 : f32
      %17 = vector.broadcast %cst_11 : f32 to vector<1x16xf32>
      %18 = arith.select %16, %9, %17 : vector<1x16xi1>, vector<1x16xf32>
      %c0_12 = arith.constant 0 : index
      %c0_13 = arith.constant 0 : index
      %19 = vector.load %arg5[%c0_12, %c0_13] : memref<1x16xf32, #tpu.memory_space<vmem>>, vector<1x16xf32>
      tpu.vector_store %arg5[%c0_12, %c0_13], %18 {strides = array<i32>} : memref<1x16xf32, #tpu.memory_space<vmem>>, vector<1x16xf32>,
    } else {
    }
    return
  }
  func.func @transform_0(%arg0: i32) -> (i32, i32) {
    %c0_i32 = arith.constant 0 : i32
    %c0_i32_0 = arith.constant 0 : i32
    %c0_i32_1 = arith.constant 0 : i32
    return %c0_i32, %c0_i32_0 : i32, i32
  }
  func.func @transform_1(%arg0: i32) -> (i32, i32) {
    %c0_i32 = arith.constant 0 : i32
    %c0_i32_0 = arith.constant 0 : i32
    %c0_i32_1 = arith.constant 0 : i32
    return %c0_i32, %c0_i32_0 : i32, i32
  }
  func.func @transform_2(%arg0: i32) -> (i32, i32) {
    %c0_i32 = arith.constant 0 : i32
    %c0_i32_0 = arith.constant 0 : i32
    %c0_i32_1 = arith.constant 0 : i32
    return %c0_i32, %c0_i32_0 : i32, i32
  }
  func.func @transform_3(%arg0: i32) -> (i32, i32) {
    %c0_i32 = arith.constant 0 : i32
    %c0_i32_0 = arith.constant 0 : i32
    return %arg0, %c0_i32 : i32, i32
  }
  func.func @transform_4(%arg0: i32) -> (i32, i32) {
    %c0_i32 = arith.constant 0 : i32
    %c0_i32_0 = arith.constant 0 : i32
    return %c0_i32, %arg0 : i32, i32
  }
}

module attributes {stable_mosaic.version = 11 : i64} {
  func.func @_keys_kernel(%arg0: i32, %arg1: i32, %arg2: memref<16x64xf32, #tpu.memory_space<vmem>>, %arg3: memref<64x32xf32, #tpu.memory_space<vmem>>, %arg4: memref<16x32xbf16, #tpu.memory_space<vmem>>) attributes {dimension_semantics = [#tpu.dimension_semantics<parallel>, #tpu.dimension_semantics<parallel>], iteration_bounds = array<i64: 1, 1>, scalar_prefetch = 0 : i64, scratch_operands = 0 : i64, tpu.core_type = #tpu.core_type<tc>, window_params = [{transform_indices = @transform_0, window_bounds = array<i64: 16, 64>}, {transform_indices = @transform_1, window_bounds = array<i64: 64, 32>}, {transform_indices = @transform_2, window_bounds = array<i64: 16, 32>}]} {
    %c0 = arith.constant 0 : index
    %c0_0 = arith.constant 0 : index
    %0 = vector.load %arg2[%c0, %c0_0] : memref<16x64xf32, #tpu.memory_space<vmem>>, vector<16x64xf32>
    %c0_1 = arith.constant 0 : index
    %c0_2 = arith.constant 0 : index
    %1 = vector.load %arg3[%c0_1, %c0_2] : memref<64x32xf32, #tpu.memory_space<vmem>>, vector<64x32xf32>
    %cst = arith.constant dense<0.000000e+00> : vector<16x32xf32>
    %2 = tpu.matmul %0, %1, %cst {dimension_numbers = #tpu.dot_dimension_numbers<[1], [0], [0], [1], [0, 0, 1, 1], [], []>} : vector<16x64xf32>, vector<64x32xf32>, vector<16x32xf32> -> vector<16x32xf32>
    %3 = arith.truncf %2 : vector<16x32xf32> to vector<16x32xbf16>
    %c0_3 = arith.constant 0 : index
    %c0_4 = arith.constant 0 : index
    %4 = vector.load %arg4[%c0_3, %c0_4] : memref<16x32xbf16, #tpu.memory_space<vmem>>, vector<16x32xbf16>
    tpu.vector_store %arg4[%c0_3, %c0_4], %3 {strides = array<i32>} : memref<16x32xbf16, #tpu.memory_space<vmem>>, vector<16x32xbf16>,
    return
  }
  func.func @transform_0(%arg0: i32, %arg1: i32) -> (i32, i32) {
    %c0_i32 = arith.constant 0 : i32
    %c0_i32_0 = arith.constant 0 : i32
    return %arg0, %c0_i32 : i32, i32
  }
  func.func @transform_1(%arg0: i32, %arg1: i32) -> (i32, i32) {
    %c0_i32 = arith.constant 0 : i32
    %c0_i32_0 = arith.constant 0 : i32
    return %c0_i32, %arg1 : i32, i32
  }
  func.func @transform_2(%arg0: i32, %arg1: i32) -> (i32, i32) {
    %c0_i32 = arith.constant 0 : i32
    return %arg0, %arg1 : i32, i32
  }
}

module attributes {stable_mosaic.version = 11 : i64} {
  func.func @_softmax_kernel(%arg0: i32, %arg1: memref<1x16xf32, #tpu.memory_space<vmem>>, %arg2: memref<1x16xf32, #tpu.memory_space<vmem>>) attributes {dimension_semantics = [#tpu.dimension_semantics<arbitrary>], iteration_bounds = array<i64: 1>, scalar_prefetch = 0 : i64, scratch_operands = 0 : i64, tpu.core_type = #tpu.core_type<tc>, window_params = [{pipeline_mode = #tpu.pipeline_mode<synchronous>, transform_indices = @transform_0, window_bounds = array<i64: 1, 16>}, {pipeline_mode = #tpu.pipeline_mode<synchronous>, transform_indices = @transform_1, window_bounds = array<i64: 1, 16>}]} {
    %c0 = arith.constant 0 : index
    %c0_0 = arith.constant 0 : index
    %0 = vector.load %arg1[%c0, %c0_0] : memref<1x16xf32, #tpu.memory_space<vmem>>, vector<1x16xf32>
    %cst = arith.constant dense<0xFF800000> : vector<1xf32>
    %1 = vector.multi_reduction <maximumf>, %0, %cst [1] : vector<1x16xf32> to vector<1xf32>
    %2 = vector.shape_cast %1 : vector<1xf32> to vector<1x1xf32>
    %3 = vector.broadcast %2 : vector<1x1xf32> to vector<1x16xf32>
    %4 = arith.subf %0, %3 : vector<1x16xf32>
    %5 = math.exp %4 : vector<1x16xf32>
    %cst_1 = arith.constant dense<0.000000e+00> : vector<1xf32>
    %6 = vector.multi_reduction <add>, %5, %cst_1 [1] : vector<1x16xf32> to vector<1xf32>
    %7 = vector.shape_cast %6 : vector<1xf32> to vector<1x1xf32>
    %8 = vector.broadcast %7 : vector<1x1xf32> to vector<1x16xf32>
    %9 = arith.divf %5, %8 : vector<1x16xf32>
    %c0_2 = arith.constant 0 : index
    %c0_3 = arith.constant 0 : index
    %10 = vector.load %arg2[%c0_2, %c0_3] : memref<1x16xf32, #tpu.memory_space<vmem>>, vector<1x16xf32>
    tpu.vector_store %arg2[%c0_2, %c0_3], %9 {strides = array<i32>} : memref<1x16xf32, #tpu.memory_space<vmem>>, vector<1x16xf32>,
    return
  }
  func.func @transform_0(%arg0: i32) -> (i32, i32) {
    %c0_i32 = arith.constant 0 : i32
    %c0_i32_0 = arith.constant 0 : i32
    %c0_i32_1 = arith.constant 0 : i32
    return %c0_i32, %c0_i32_0 : i32, i32
  }
  func.func @transform_1(%arg0: i32) -> (i32, i32) {
    %c0_i32 = arith.constant 0 : i32
    %c0_i32_0 = arith.constant 0 : i32
    %c0_i32_1 = arith.constant 0 : i32
    return %c0_i32, %c0_i32_0 : i32, i32
  }
}

</mosaic_0001>

<llo_original>
// kernel: attn_forward.4
$region0: #{attn_forward.4}
  #allocation0 [shape = 'u32[]', space=smem, size = 0x4, offset = 0x4, fixed_abs, tag = 'smem constant byte address 0x4 - core index']
  #allocation1 [shape = 'u32[144,128]{1,0:T(1,128)}', space=vmem, size = 0x12000, scoped, tag = 'internal scratch']
  %s0 = inlined_call_operand.vmem [shape: bf16[1,48], index: 0, kind: input, shape index: {}]
  %s1 = inlined_call_operand.vmem [shape: bf16[48,32], index: 1, kind: input, shape index: {}]
  %s2 = inlined_call_operand.vmem [shape: f32[1,32], index: 2, kind: input, shape index: {}]
  %s3 = inlined_call_operand.vmem [shape: bf16[16,32], index: 3, kind: input, shape index: {}]
  %s4 = inlined_call_operand.vmem [shape: f32[1,16], index: 4, kind: output, shape index: {}]
  %s5 = sld [smem:[#allocation0]]
  $region30: #{attn_forward.4} parent=0
    _
  %s7 = ssub.s32 1, %s5
  %s8 = scalar_select 0, %s7, %s5
  // Predicated region
  $region2: #{attn_forward.4} parent=0 // pred_check
    _
  $region3: #{attn_forward.4} parent=0 // pred_check_branch
    %10 = sbr.rel (0) target = $region5
  $region4: #{attn_forward.4} parent=0 // pred_region
    _
  $region5: #{attn_forward.4} parent=0 // pred_fallthru
    _
  // Predicated region
  $region6: #{attn_forward.4} parent=0 // pred_check
    _
  $region7: #{attn_forward.4} parent=0 // pred_check_branch
    %12 = sbr.rel (0) target = $region9
  $region8: #{attn_forward.4} parent=0 // pred_region
    _
  $region9: #{attn_forward.4} parent=0 // pred_fallthru
    _
  // Predicated region
  $region10: #{attn_forward.4} parent=0 // pred_check
    _
  $region11: #{attn_forward.4} parent=0 // pred_check_branch
    %14 = sbr.rel (0) target = $region13
  $region12: #{attn_forward.4} parent=0 // pred_region
    _
  $region13: #{attn_forward.4} parent=0 // pred_fallthru
    _
  // Predicated region
  $region14: #{attn_forward.4} parent=0 // pred_check
    _
  $region15: #{attn_forward.4} parent=0 // pred_check_branch
    %16 = sbr.rel (0) target = $region17
  $region16: #{attn_forward.4} parent=0 // pred_region
    _
  $region17: #{attn_forward.4} parent=0 // pred_fallthru
    _
  %v18 = vld [vmem:[%s0] sm:$0x1]
  %v19 = vld [vmem:[%s1] sm:$0xf]
  %v20 = vld [vmem:[%s1 + $0x4] sm:$0xf]
  %v21 = vld [vmem:[%s1 + $0x8] sm:$0xf]
  %v22 = vld [vmem:[%s1 + $0xc] sm:$0xf]
  %v23 = vld [vmem:[%s1 + $0x10] sm:$0xf]
  %v24 = vld [vmem:[%s1 + $0x14] sm:$0xf]
  %v31 = vunpack.c.l.b16 %v19
  %v32 = vunpack.c.l.b16 %v20
  %v33 = vunpack.c.l.b16 %v21
  %v34 = vunpack.c.l.b16 %v22
  %v35 = vunpack.c.l.b16 %v23
  %v36 = vunpack.c.l.b16 %v24
  %v37 = vpack.c.b16 %v32, %v31
  %v38 = vpack.c.b16 %v34, %v33
  %v39 = vpack.c.b16 %v36, %v35
  %vm43 = vcmask 392192
  %v45 = vsel %vm43, %v18, 0
  %47 = vmatprep.subr.bf16.mxu0 0
  %48 = vmatpush1.bf16.msra.mxu0 %v37
  %49 = vmatprep.subr.bf16.mxu0 0
  %50 = vmatpush1.bf16.msra.mxu0 %v38
  %51 = vmatprep.subr.bf16.mxu0 0
  %52 = vmatpush1.bf16.msra.mxu0 %v39
  %53 = vmatprep.subr.bf16.mxu0 0
  %54 = vmatpush1.bf16.msra.mxu0 0
  %55 = vmatprep.subr.bf16.mxu0 0
  %56 = vmatpush1.bf16.msra.mxu0 0
  %57 = vmatprep.subr.bf16.mxu0 0
  %58 = vmatpush1.bf16.msra.mxu0 0
  %59 = vmatprep.subr.bf16.mxu0 0
  %60 = vmatpush1.bf16.msra.mxu0 0
  %61 = vmatprep.subr.bf16.mxu0 0
  %62 = vmatpush1.bf16.msra.mxu0 0
  %63 = vmatprep.subr.bf16.mxu0 0
  %64 = vmatpush1.bf16.msra.mxu0 0
  %65 = vmatprep.subr.bf16.mxu0 0
  %66 = vmatpush1.bf16.msra.mxu0 0
  %67 = vmatprep.subr.bf16.mxu0 0
  %68 = vmatpush1.bf16.msra.mxu0 0
  %69 = vmatprep.subr.bf16.mxu0 0
  %70 = vmatpush1.bf16.msra.mxu0 0
  %71 = vmatprep.subr.bf16.mxu0 0
  %72 = vmatpush1.bf16.msra.mxu0 0
  %73 = vmatprep.subr.bf16.mxu0 0
  %74 = vmatpush1.bf16.msra.mxu0 0
  %75 = vmatprep.subr.bf16.mxu0 0
  %76 = vmatpush1.bf16.msra.mxu0 0
  %77 = vmatprep.subr.bf16.mxu0 0
  %78 = vmatpush1.bf16.msra.mxu0 0
  %79 = vmatprep.mubr.bf16.mxu0 0
  %80 = vmatmul.mubr.bf16.gmra.mrb[0].mxu0 %v45
  %v81 = vpop.f32.mrb[0].mxu0
  %v82 = vadd.f32 0.0, %v81
  %v83 = vpop.f32.mrb[0].mxu0
  %v84 = vpop.f32.mrb[0].mxu0
  %v85 = vpop.f32.mrb[0].mxu0
  %86 = vdwg.mxu0
  %v87 = vld [vmem:[%s3] sm:$0xf]
  %v88 = vld [vmem:[%s3 + $0x4] sm:$0xf]
  %v89 = vunpack.c.l.bf16 %v87
  %v90 = vunpack.c.l.bf16 %v88
  %v91 = vlaneseq
  %v92 = vshrl.u32 %v91, 7
  %v93 = vsub.s32 0, %v92
  %v94 = vrot.slane %v82, %v93
  %v95 = vadd.f32 %v89, %v94
  %v96 = vadd.f32 %v90, %v94
  %v97 = vtanh.pop %v95
  %v98 = vtanh.pop %v96
  %v99 = vld [vmem:[%s2] sm:$0x1]
  %vm100 = vcmask 261120
  %v102 = vsel %vm100, %v99, 0
  %v105 = vsel %vm100, %v97, 0
  %v108 = vsel %vm100, %v98, 0
  %110 = vmatprep.subr.mxu0 0.0
  %111 = vmatpush1.xpose.msra.mxu0 %v105
  %112 = vmatprep.subr.mxu0 0.0
  %113 = vmatpush1.xpose.msra.mxu0 %v108
  %114 = vmatprep.subr.mxu0 0.0
  %115 = vmatpush1.xpose.msra.mxu0 0.0
  %116 = vmatprep.subr.mxu0 0.0
  %117 = vmatpush1.xpose.msra.mxu0 0.0
  %118 = vmatprep.subr.mxu0 0.0
  %119 = vmatpush1.xpose.msra.mxu0 0.0
  %120 = vmatprep.subr.mxu0 0.0
  %121 = vmatpush1.xpose.msra.mxu0 0.0
  %122 = vmatprep.subr.mxu0 0.0
  %123 = vmatpush1.xpose.msra.mxu0 0.0
  %124 = vmatprep.subr.mxu0 0.0
  %125 = vmatpush1.xpose.msra.mxu0 0.0
  %126 = vmatprep.subr.mxu0 0.0
  %127 = vmatpush1.xpose.msra.mxu0 0.0
  %128 = vmatprep.subr.mxu0 0.0
  %129 = vmatpush1.xpose.msra.mxu0 0.0
  %130 = vmatprep.subr.mxu0 0.0
  %131 = vmatpush1.xpose.msra.mxu0 0.0
  %132 = vmatprep.subr.mxu0 0.0
  %133 = vmatpush1.xpose.msra.mxu0 0.0
  %134 = vmatprep.subr.mxu0 0.0
  %135 = vmatpush1.xpose.msra.mxu0 0.0
  %136 = vmatprep.subr.mxu0 0.0
  %137 = vmatpush1.xpose.msra.mxu0 0.0
  %138 = vmatprep.subr.mxu0 0.0
  %139 = vmatpush1.xpose.msra.mxu0 0.0
  %140 = vmatprep.subr.mxu0 0.0
  %141 = vmatpush1.xpose.msra.mxu0 0.0
  %142 = vmatprep.subr.mxu0 0.0
  %143 = vmatpush1.xpose.msra.mxu0 0.0
  %144 = vmatprep.subr.mxu0 0.0
  %145 = vmatpush1.xpose.msra.mxu0 0.0
  %146 = vmatprep.subr.mxu0 0.0
  %147 = vmatpush1.xpose.msra.mxu0 0.0
  %148 = vmatprep.subr.mxu0 0.0
  %149 = vmatpush1.xpose.msra.mxu0 0.0
  %150 = vmatprep.subr.mxu0 0.0
  %151 = vmatpush1.xpose.msra.mxu0 0.0
  %152 = vmatprep.subr.mxu0 0.0
  %153 = vmatpush1.xpose.msra.mxu0 0.0
  %154 = vmatprep.subr.mxu0 0.0
  %155 = vmatpush1.xpose.msra.mxu0 0.0
  %156 = vmatprep.subr.mxu0 0.0
  %157 = vmatpush1.xpose.msra.mxu0 0.0
  %158 = vmatprep.subr.mxu0 0.0
  %159 = vmatpush1.xpose.msra.mxu0 0.0
  %160 = vmatprep.subr.mxu0 0.0
  %161 = vmatpush1.xpose.msra.mxu0 0.0
  %162 = vmatprep.subr.mxu0 0.0
  %163 = vmatpush1.xpose.msra.mxu0 0.0
  %164 = vmatprep.subr.mxu0 0.0
  %165 = vmatpush1.xpose.msra.mxu0 0.0
  %166 = vmatprep.subr.mxu0 0.0
  %167 = vmatpush1.xpose.msra.mxu0 0.0
  %168 = vmatprep.subr.mxu0 0.0
  %169 = vmatpush1.xpose.msra.mxu0 0.0
  %170 = vmatprep.subr.mxu0 0.0
  %171 = vmatpush1.xpose.msra.mxu0 0.0
  %172 = vmatprep.subr.mxu0 0.0
  %173 = vmatpush1.xpose.msra.mxu0 0.0
  %174 = vmatprep.mubr.f32.mxu0 0.0
  %175 = vmatmul.mubr.f32.gmra.mrb[0].mxu0 %v102
  %v176 = vpop.f32.mrb[0].mxu0
  %v177 = vadd.f32 0.0, %v176
  %v178 = vpop.f32.mrb[0].mxu0
  %179 = vdwg.mxu0
  %vm180 = vcmask 122880
  %181 = vst.msk [vmem:[%s4] sm:$0x1] %vm180, %v177
  %p182 = scmp.eq.s32.totalorder 0, 0
  // Predicated region
  $region18: #{attn_forward.4} parent=0 // pred_check
    %p183 = pneg %p182
  $region19: #{attn_forward.4} parent=0 // pred_check_branch
    %185 = sbr.rel (%p183) target = $region21
  $region20: #{attn_forward.4} parent=0 // pred_region
    %v186 = vlaneseq
    %v187 = vand.u32 %v186, 127
    %vm188 = vcmp.lt.s32.totalorder %v187, 8
    %v189 = vsel %vm188, %v177, -1e+30
    %190 = vst.msk [vmem:[%s4] sm:$0x1] %vm180, %v189
  $region21: #{attn_forward.4} parent=0 // pred_fallthru
    _
  // Predicated region
  $region22: #{attn_forward.4} parent=0 // pred_check
    _
  $region23: #{attn_forward.4} parent=0 // pred_check_branch
    %192 = sbr.rel (0) target = $region25
  $region24: #{attn_forward.4} parent=0 // pred_region
    _
  $region25: #{attn_forward.4} parent=0 // pred_fallthru
    _
  // Predicated region
  $region26: #{attn_forward.4} parent=0 // pred_check
    _
  $region27: #{attn_forward.4} parent=0 // pred_check_branch
    %194 = sbr.rel (0) target = $region29
  $region28: #{attn_forward.4} parent=0 // pred_region
    _
  $region29: #{attn_forward.4} parent=0 // pred_fallthru
    _

// kernel: attn_forward.5
$region0: #{attn_forward.5}
  #allocation0 [shape = 'u32[]', space=smem, size = 0x4, offset = 0x4, fixed_abs, tag = 'smem constant byte address 0x4 - core index']
  #allocation1 [shape = 'u32[144,128]{1,0:T(1,128)}', space=vmem, size = 0x12000, scoped, tag = 'internal scratch']
  %s0 = inlined_call_operand.vmem [shape: f32[1,16], index: 0, kind: input, shape index: {}]
  %s1 = inlined_call_operand.vmem [shape: f32[1,16], index: 1, kind: output, shape index: {}]
  %s2 = sld [smem:[#allocation0]]
  $region14: #{attn_forward.5} parent=0
    _
  %s4 = ssub.s32 1, %s2
  %s5 = scalar_select 0, %s4, %s2
  // Predicated region
  $region2: #{attn_forward.5} parent=0 // pred_check
    _
  $region3: #{attn_forward.5} parent=0 // pred_check_branch
    %7 = sbr.rel (0) target = $region5
  $region4: #{attn_forward.5} parent=0 // pred_region
    _
  $region5: #{attn_forward.5} parent=0 // pred_fallthru
    _
  %v8 = vld [vmem:[%s0] sm:$0x1]
  %vm9 = vcmask 122880
  %v10 = vsel %vm9, %v8, -inf
  %11 = vmax.xlane.f32.xlu0 %v10
  %v12 = vpop.xlane.xlu0 %11
  %v13 = vsub.f32 %v8, %v12
  %v14 = vmul.f32 %v13, 1.442695
  %v15 = vpow.pop %v14
  %v16 = vsel %vm9, %v15, 0.0
  %17 = vadd.xlane.f32.xlu0 %v16
  %v18 = vpop.xlane.xlu0 %17
  %v19 = vrcp.pop %v18
  %v20 = vmul.f32 %v15, %v19
  %21 = vst.msk [vmem:[%s1] sm:$0x1] %vm9, %v20
  // Predicated region
  $region6: #{attn_forward.5} parent=0 // pred_check
    _
  $region7: #{attn_forward.5} parent=0 // pred_check_branch
    %23 = sbr.rel (0) target = $region9
  $region8: #{attn_forward.5} parent=0 // pred_region
    _
  $region9: #{attn_forward.5} parent=0 // pred_fallthru
    _
  // Predicated region
  $region10: #{attn_forward.5} parent=0 // pred_check
    _
  $region11: #{attn_forward.5} parent=0 // pred_check_branch
    %25 = sbr.rel (0) target = $region13
  $region12: #{attn_forward.5} parent=0 // pred_region
    _
  $region13: #{attn_forward.5} parent=0 // pred_fallthru
    _

// kernel: attn_forward.3
$region0: #{attn_forward.3}
  #allocation0 [shape = 'u32[]', space=smem, size = 0x4, offset = 0x4, fixed_abs, tag = 'smem constant byte address 0x4 - core index']
  #allocation1 [shape = 'u32[144,128]{1,0:T(1,128)}', space=vmem, size = 0x12000, scoped, tag = 'internal scratch']
  %s0 = inlined_call_operand.vmem [shape: f32[16,64], index: 0, kind: input, shape index: {}]
  %s1 = inlined_call_operand.vmem [shape: f32[64,32], index: 1, kind: input, shape index: {}]
  %s2 = inlined_call_operand.vmem [shape: bf16[16,32], index: 2, kind: output, shape index: {}]
  %s3 = sld [smem:[#allocation0]]
  $region18: #{attn_forward.3} parent=0
    _
  %s5 = ssub.s32 1, %s3
  %s6 = scalar_select 0, %s5, %s3
  // Predicated region
  $region2: #{attn_forward.3} parent=0 // pred_check
    _
  $region3: #{attn_forward.3} parent=0 // pred_check_branch
    %8 = sbr.rel (0) target = $region5
  $region4: #{attn_forward.3} parent=0 // pred_region
    _
  $region5: #{attn_forward.3} parent=0 // pred_fallthru
    _
  // Predicated region
  $region6: #{attn_forward.3} parent=0 // pred_check
    _
  $region7: #{attn_forward.3} parent=0 // pred_check_branch
    %10 = sbr.rel (0) target = $region9
  $region8: #{attn_forward.3} parent=0 // pred_region
    _
  $region9: #{attn_forward.3} parent=0 // pred_fallthru
    _
  %v11 = vld [vmem:[%s0] sm:$0xff]
  %v12 = vld [vmem:[%s0 + $0x8] sm:$0xff]
  %v13 = vld [vmem:[%s1] sm:$0xff]
  %v14 = vld [vmem:[%s1 + $0x8] sm:$0xff]
  %v15 = vld [vmem:[%s1 + $0x10] sm:$0xff]
  %v16 = vld [vmem:[%s1 + $0x18] sm:$0xff]
  %v17 = vld [vmem:[%s1 + $0x20] sm:$0xff]
  %v18 = vld [vmem:[%s1 + $0x28] sm:$0xff]
  %v19 = vld [vmem:[%s1 + $0x30] sm:$0xff]
  %v20 = vld [vmem:[%s1 + $0x38] sm:$0xff]
  %vm21 = vcmask 523264
  %v23 = vsel %vm21, %v11, 0
  %v26 = vsel %vm21, %v12, 0
  %28 = vmatprep.subr.mxu0 0.0
  %29 = vmatpush1.msra.mxu0 %v13
  %30 = vmatprep.subr.mxu0 0.0
  %31 = vmatpush1.msra.mxu0 %v14
  %32 = vmatprep.subr.mxu0 0.0
  %33 = vmatpush1.msra.mxu0 %v15
  %34 = vmatprep.subr.mxu0 0.0
  %35 = vmatpush1.msra.mxu0 %v16
  %36 = vmatprep.subr.mxu0 0.0
  %37 = vmatpush1.msra.mxu0 %v17
  %38 = vmatprep.subr.mxu0 0.0
  %39 = vmatpush1.msra.mxu0 %v18
  %40 = vmatprep.subr.mxu0 0.0
  %41 = vmatpush1.msra.mxu0 %v19
  %42 = vmatprep.subr.mxu0 0.0
  %43 = vmatpush1.msra.mxu0 %v20
  %44 = vmatprep.subr.mxu0 0.0
  %45 = vmatpush1.msra.mxu0 0.0
  %46 = vmatprep.subr.mxu0 0.0
  %47 = vmatpush1.msra.mxu0 0.0
  %48 = vmatprep.subr.mxu0 0.0
  %49 = vmatpush1.msra.mxu0 0.0
  %50 = vmatprep.subr.mxu0 0.0
  %51 = vmatpush1.msra.mxu0 0.0
  %52 = vmatprep.subr.mxu0 0.0
  %53 = vmatpush1.msra.mxu0 0.0
  %54 = vmatprep.subr.mxu0 0.0
  %55 = vmatpush1.msra.mxu0 0.0
  %56 = vmatprep.subr.mxu0 0.0
  %57 = vmatpush1.msra.mxu0 0.0
  %58 = vmatprep.subr.mxu0 0.0
  %59 = vmatpush1.msra.mxu0 0.0
  %60 = vmatprep.subr.mxu0 0.0
  %61 = vmatpush1.msra.mxu0 0.0
  %62 = vmatprep.subr.mxu0 0.0
  %63 = vmatpush1.msra.mxu0 0.0
  %64 = vmatprep.subr.mxu0 0.0
  %65 = vmatpush1.msra.mxu0 0.0
  %66 = vmatprep.subr.mxu0 0.0
  %67 = vmatpush1.msra.mxu0 0.0
  %68 = vmatprep.subr.mxu0 0.0
  %69 = vmatpush1.msra.mxu0 0.0
  %70 = vmatprep.subr.mxu0 0.0
  %71 = vmatpush1.msra.mxu0 0.0
  %72 = vmatprep.subr.mxu0 0.0
  %73 = vmatpush1.msra.mxu0 0.0
  %74 = vmatprep.subr.mxu0 0.0
  %75 = vmatpush1.msra.mxu0 0.0
  %76 = vmatprep.subr.mxu0 0.0
  %77 = vmatpush1.msra.mxu0 0.0
  %78 = vmatprep.subr.mxu0 0.0
  %79 = vmatpush1.msra.mxu0 0.0
  %80 = vmatprep.subr.mxu0 0.0
  %81 = vmatpush1.msra.mxu0 0.0
  %82 = vmatprep.subr.mxu0 0.0
  %83 = vmatpush1.msra.mxu0 0.0
  %84 = vmatprep.subr.mxu0 0.0
  %85 = vmatpush1.msra.mxu0 0.0
  %86 = vmatprep.subr.mxu0 0.0
  %87 = vmatpush1.msra.mxu0 0.0
  %88 = vmatprep.subr.mxu0 0.0
  %89 = vmatpush1.msra.mxu0 0.0
  %90 = vmatprep.subr.mxu0 0.0
  %91 = vmatpush1.msra.mxu0 0.0
  %92 = vmatprep.mubr.f32.mxu0 0.0
  %93 = vmatmul.mubr.f32.gmra.mrb[0].mxu0 %v23
  %v94 = vpop.f32.mrb[0].mxu0
  %v95 = vadd.f32 0.0, %v94
  %v96 = vpop.f32.mrb[0].mxu0
  %97 = vmatprep.mubr.f32.mxu0 0.0
  %98 = vmatmul.mubr.f32.gmra.mrb[0].mxu0 %v26
  %v99 = vpop.f32.mrb[0].mxu0
  %v100 = vadd.f32 0.0, %v99
  %v101 = vpop.f32.mrb[0].mxu0
  %102 = vdwg.mxu0
  %v103 = vpack.c.bf16 %v100, %v95
  %v105 = vunpack.c.l.b16 %v103
  %v106 = vunpack.c.h.b16 %v103
  %v107 = vpack.c.b16 %v105, %v105
  %v108 = vpack.c.b16 %v106, %v106
  %vm111 = vcmask 257024
  %112 = vst.msk [vmem:[%s2] sm:$0xf] %vm111, %v107
  %113 = vst.msk [vmem:[%s2 + $0x4] sm:$0xf] %vm111, %v108
  // Predicated region
  $region10: #{attn_forward.3} parent=0 // pred_check
    _
  $region11: #{attn_forward.3} parent=0 // pred_check_branch
    %115 = sbr.rel (0) target = $region13
  $region12: #{attn_forward.3} parent=0 // pred_region
    _
  $region13: #{attn_forward.3} parent=0 // pred_fallthru
    _
  // Predicated region
  $region14: #{attn_forward.3} parent=0 // pred_check
    _
  $region15: #{attn_forward.3} parent=0 // pred_check_branch
    %117 = sbr.rel (0) target = $region17
  $region16: #{attn_forward.3} parent=0 // pred_region
    _
  $region17: #{attn_forward.3} parent=0 // pred_fallthru
    _

</llo_original>
